<compile_context>
chip_gen: v5e
topology: v5e:2x2
jax: 0.10.0
libtpu: 0.0.40
codegen_flags: <defaults>
</compile_context>

<pallas_src>
import functools

import jax
import jax.numpy as jnp
from jax.experimental import pallas as pl
from jax.experimental.pallas import tpu as pltpu


def _round_up(x, m):
    return ((x + m - 1) // m) * m


def _mlp_kernel(x_ref, w1_ref, b1_ref, w2_ref, b2_ref, w3_ref, b3_ref, o_ref):
    # bf16 cast of x happens here in VMEM — HBM only sees the f32 read once.
    xb = x_ref[...].astype(jnp.bfloat16)

    # fc1 + sigmoid (tanh form: one EUP push per element instead of exp + rcp)
    z1 = jnp.dot(xb, w1_ref[...], preferred_element_type=jnp.float32) + b1_ref[...]
    h1 = 0.5 + 0.5 * jnp.tanh(0.5 * z1)

    # fc2 + sigmoid
    z2 = jnp.dot(h1.astype(jnp.bfloat16), w2_ref[...],
                 preferred_element_type=jnp.float32) + b2_ref[...]
    h2 = 0.5 + 0.5 * jnp.tanh(0.5 * z2)

    # fc3 (no activation — matches the PyTorch forward; CE loss handles softmax)
    z3 = jnp.dot(h2.astype(jnp.bfloat16), w3_ref[...],
                 preferred_element_type=jnp.float32) + b3_ref[...]
    o_ref[...] = z3.astype(o_ref.dtype)


@functools.partial(jax.jit, static_argnames=("block_b",))
def linear_classifier_forward(x, w1, b1, w2, b2, w3, b3, *, block_b=2048):
    """x: (B, D_in) f32; weights (in, out) (f32 or bf16); biases (1, out) f32.
    Returns (B, n_classes) f32 logits."""
    B, D_in = x.shape
    H1 = w1.shape[1]          # 128
    H2 = w2.shape[1]          # 256
    n_classes = w3.shape[1]

    # Lane-dense output: pad the last layer to a multiple of 128 columns with
    # zeros so the final store is an unmasked full-lane vst; slice afterwards.
    N_pad = max(128, _round_up(n_classes, 128))
    w3p = jnp.pad(w3, ((0, 0), (0, N_pad - n_classes)))
    b3p = jnp.pad(b3, ((0, 0), (0, N_pad - n_classes)))

    # bf16 MXU operands; no-ops if the caller already pre-cast at init time.
    w1b = w1.astype(jnp.bfloat16)
    w2b = w2.astype(jnp.bfloat16)
    w3b = w3p.astype(jnp.bfloat16)

    # Batch handling: only pad B up to a sublane multiple (at most 7 rows) —
    # never a full pad-to-TB copy. The grid is cdiv-sized, so a ragged last
    # tile is handled by Pallas's masked output stores.
    B_pad = _round_up(B, 8)
    xp = x if B_pad == B else jnp.pad(x, ((0, B_pad - B), (0, 0)))

    if B_pad <= 1024:
        TB = min(block_b, B_pad)                       # one (or few) tiles
    else:
        # >= 2 balanced tiles so both v7x TensorCores get work.
        TB = min(block_b, _round_up(pl.cdiv(B_pad, 2), 8))
    grid = (pl.cdiv(B_pad, TB),)

    # Weights/biases: same block for every grid step -> stay VMEM-resident.
    resident = lambda shape: pl.BlockSpec(shape, lambda i: (0,) * len(shape))

    out = pl.pallas_call(
        _mlp_kernel,
        out_shape=jax.ShapeDtypeStruct((B_pad, N_pad), jnp.float32),
        grid_spec=pl.GridSpec(
            grid=grid,
            in_specs=[
                pl.BlockSpec((TB, D_in), lambda i: (i, 0)),     # x: tiled over batch
                resident((D_in, H1)), resident((1, H1)),
                resident((H1, H2)),   resident((1, H2)),
                resident((H2, N_pad)), resident((1, N_pad)),
            ],
            out_specs=pl.BlockSpec((TB, N_pad), lambda i: (i, 0)),
        ),
        compiler_params=pltpu.CompilerParams(
            # Batch tiles are independent -> shard across v7x's 2 TensorCores.
            dimension_semantics=("parallel",),
            # TB<=2048 fits every generation's scoped-VMEM default (v5e 16 MiB);
            # only raise the limit (kept <= v7x's 64 MiB physical) for bigger tiles.
            vmem_limit_bytes=(48 * 1024 * 1024 if TB > 2048 else None),
        ),
    )(xp, w1b, b1, w2b, b2, w3b, b3p)

    # TODO(synk): in a full training step, fold this slice into the CE loss
    # (e.g. pad b3 with -1e9 and softmax over the padded 128 columns) instead
    # of re-reading the padded output here.
    return out[:B, :n_classes]


def init_params(key, input_dims, n_classes):
    """Deterministic init mimicking PyTorch nn.Linear default
    (uniform(-1/sqrt(fan_in), 1/sqrt(fan_in))), weights stored as (in, out)."""
    dims = [(input_dims, 128), (128, 256), (256, n_classes)]
    params = []
    for fan_in, fan_out in dims:
        key, kw, kb = jax.random.split(key, 3)
        bound = 1.0 / jnp.sqrt(jnp.float32(fan_in))
        w = jax.random.uniform(kw, (fan_in, fan_out), jnp.float32, -bound, bound)
        b = jax.random.uniform(kb, (1, fan_out), jnp.float32, -bound, bound)
        params += [w, b]
    return params


def reference_forward(x, w1, b1, w2, b2, w3, b3):
    h1 = jax.nn.sigmoid(x @ w1 + b1)
    h2 = jax.nn.sigmoid(h1 @ w2 + b2)
    return h2 @ w3 + b3


if __name__ == "__main__":
    key = jax.random.PRNGKey(0)
    key, kx = jax.random.split(key)

    batch = 8
    input_dims = 64       # the module's flattened `input_dims`
    n_classes = 10

    x = jax.random.normal(kx, (batch, input_dims), jnp.float32)
    w1, b1, w2, b2, w3, b3 = init_params(key, input_dims, n_classes)

    # Cast weights to bf16 once at parameter-creation time (review item); the
    # kernel casts activations itself, biases stay f32.
    w1 = w1.astype(jnp.bfloat16)
    w2 = w2.astype(jnp.bfloat16)
    w3 = w3.astype(jnp.bfloat16)

    out = linear_classifier_forward(x, w1, b1, w2, b2, w3, b3)
    out = jax.block_until_ready(out)

    # Reference in f32 using the same (bf16-rounded) weights.
    ref = reference_forward(x, w1.astype(jnp.float32), b1,
                            w2.astype(jnp.float32), b2,
                            w3.astype(jnp.float32), b3)
    assert out.shape == (batch, n_classes)
    # Remaining error is only bf16 activation rounding on MXU operands
    # (accumulation is f32, sigmoid is the exact tanh form).
    err = jnp.max(jnp.abs(out - ref))
    assert jnp.allclose(out, ref, atol=3e-2, rtol=3e-2), err

    print("KERNEL_OK")
</pallas_src>

<mosaic_0001>
module attributes {stable_mosaic.version = 11 : i64} {
  func.func @_mlp_kernel(%arg0: i32, %arg1: memref<8x64xf32, #tpu.memory_space<vmem>>, %arg2: memref<64x128xbf16, #tpu.memory_space<vmem>>, %arg3: memref<1x128xf32, #tpu.memory_space<vmem>>, %arg4: memref<128x256xbf16, #tpu.memory_space<vmem>>, %arg5: memref<1x256xf32, #tpu.memory_space<vmem>>, %arg6: memref<256x128xbf16, #tpu.memory_space<vmem>>, %arg7: memref<1x128xf32, #tpu.memory_space<vmem>>, %arg8: memref<8x128xf32, #tpu.memory_space<vmem>>) attributes {dimension_semantics = [#tpu.dimension_semantics<parallel>], iteration_bounds = array<i64: 1>, scalar_prefetch = 0 : i64, scratch_operands = 0 : i64, tpu.core_type = #tpu.core_type<tc>, window_params = [{transform_indices = @transform_0, window_bounds = array<i64: 8, 64>}, {pipeline_mode = #tpu.pipeline_mode<synchronous>, transform_indices = @transform_1, window_bounds = array<i64: 64, 128>}, {pipeline_mode = #tpu.pipeline_mode<synchronous>, transform_indices = @transform_2, window_bounds = array<i64: 1, 128>}, {pipeline_mode = #tpu.pipeline_mode<synchronous>, transform_indices = @transform_3, window_bounds = array<i64: 128, 256>}, {pipeline_mode = #tpu.pipeline_mode<synchronous>, transform_indices = @transform_4, window_bounds = array<i64: 1, 256>}, {pipeline_mode = #tpu.pipeline_mode<synchronous>, transform_indices = @transform_5, window_bounds = array<i64: 256, 128>}, {pipeline_mode = #tpu.pipeline_mode<synchronous>, transform_indices = @transform_6, window_bounds = array<i64: 1, 128>}, {transform_indices = @transform_7, window_bounds = array<i64: 8, 128>}]} {
    %c0 = arith.constant 0 : index
    %c0_0 = arith.constant 0 : index
    %0 = vector.load %arg1[%c0, %c0_0] : memref<8x64xf32, #tpu.memory_space<vmem>>, vector<8x64xf32>
    %1 = arith.truncf %0 : vector<8x64xf32> to vector<8x64xbf16>
    %c0_1 = arith.constant 0 : index
    %c0_2 = arith.constant 0 : index
    %2 = vector.load %arg2[%c0_1, %c0_2] : memref<64x128xbf16, #tpu.memory_space<vmem>>, vector<64x128xbf16>
    %cst = arith.constant dense<0.000000e+00> : vector<8x128xf32>
    %3 = tpu.matmul %1, %2, %cst {dimension_numbers = #tpu.dot_dimension_numbers<[1], [0], [0], [1], [0, 0, 1, 1], [], []>} : vector<8x64xbf16>, vector<64x128xbf16>, vector<8x128xf32> -> vector<8x128xf32>
    %c0_3 = arith.constant 0 : index
    %c0_4 = arith.constant 0 : index
    %4 = vector.load %arg3[%c0_3, %c0_4] : memref<1x128xf32, #tpu.memory_space<vmem>>, vector<1x128xf32>
    %5 = vector.broadcast %4 : vector<1x128xf32> to vector<8x128xf32>
    %6 = arith.addf %3, %5 : vector<8x128xf32>
    %cst_5 = arith.constant 5.000000e-01 : f32
    %7 = vector.broadcast %cst_5 : f32 to vector<8x128xf32>
    %8 = arith.mulf %7, %6 : vector<8x128xf32>
    %9 = math.tanh %8 : vector<8x128xf32>
    %cst_6 = arith.constant 5.000000e-01 : f32
    %10 = vector.broadcast %cst_6 : f32 to vector<8x128xf32>
    %11 = arith.mulf %10, %9 : vector<8x128xf32>
    %cst_7 = arith.constant 5.000000e-01 : f32
    %12 = vector.broadcast %cst_7 : f32 to vector<8x128xf32>
    %13 = arith.addf %12, %11 : vector<8x128xf32>
    %14 = arith.truncf %13 : vector<8x128xf32> to vector<8x128xbf16>
    %c0_8 = arith.constant 0 : index
    %c0_9 = arith.constant 0 : index
    %15 = vector.load %arg4[%c0_8, %c0_9] : memref<128x256xbf16, #tpu.memory_space<vmem>>, vector<128x256xbf16>
    %cst_10 = arith.constant dense<0.000000e+00> : vector<8x256xf32>
    %16 = tpu.matmul %14, %15, %cst_10 {dimension_numbers = #tpu.dot_dimension_numbers<[1], [0], [0], [1], [0, 0, 1, 1], [], []>} : vector<8x128xbf16>, vector<128x256xbf16>, vector<8x256xf32> -> vector<8x256xf32>
    %c0_11 = arith.constant 0 : index
    %c0_12 = arith.constant 0 : index
    %17 = vector.load %arg5[%c0_11, %c0_12] : memref<1x256xf32, #tpu.memory_space<vmem>>, vector<1x256xf32>
    %18 = vector.broadcast %17 : vector<1x256xf32> to vector<8x256xf32>
    %19 = arith.addf %16, %18 : vector<8x256xf32>
    %cst_13 = arith.constant 5.000000e-01 : f32
    %20 = vector.broadcast %cst_13 : f32 to vector<8x256xf32>
    %21 = arith.mulf %20, %19 : vector<8x256xf32>
    %22 = math.tanh %21 : vector<8x256xf32>
    %cst_14 = arith.constant 5.000000e-01 : f32
    %23 = vector.broadcast %cst_14 : f32 to vector<8x256xf32>
    %24 = arith.mulf %23, %22 : vector<8x256xf32>
    %cst_15 = arith.constant 5.000000e-01 : f32
    %25 = vector.broadcast %cst_15 : f32 to vector<8x256xf32>
    %26 = arith.addf %25, %24 : vector<8x256xf32>
    %27 = arith.truncf %26 : vector<8x256xf32> to vector<8x256xbf16>
    %c0_16 = arith.constant 0 : index
    %c0_17 = arith.constant 0 : index
    %28 = vector.load %arg6[%c0_16, %c0_17] : memref<256x128xbf16, #tpu.memory_space<vmem>>, vector<256x128xbf16>
    %cst_18 = arith.constant dense<0.000000e+00> : vector<8x128xf32>
    %29 = tpu.matmul %27, %28, %cst_18 {dimension_numbers = #tpu.dot_dimension_numbers<[1], [0], [0], [1], [0, 0, 1, 1], [], []>} : vector<8x256xbf16>, vector<256x128xbf16>, vector<8x128xf32> -> vector<8x128xf32>
    %c0_19 = arith.constant 0 : index
    %c0_20 = arith.constant 0 : index
    %30 = vector.load %arg7[%c0_19, %c0_20] : memref<1x128xf32, #tpu.memory_space<vmem>>, vector<1x128xf32>
    %31 = vector.broadcast %30 : vector<1x128xf32> to vector<8x128xf32>
    %32 = arith.addf %29, %31 : vector<8x128xf32>
    %c0_21 = arith.constant 0 : index
    %c0_22 = arith.constant 0 : index
    %33 = vector.load %arg8[%c0_21, %c0_22] : memref<8x128xf32, #tpu.memory_space<vmem>>, vector<8x128xf32>
    tpu.vector_store %arg8[%c0_21, %c0_22], %32 {strides = array<i32>} : memref<8x128xf32, #tpu.memory_space<vmem>>, vector<8x128xf32>,
    return
  }
  func.func @transform_0(%arg0: i32) -> (i32, i32) {
    %c0_i32 = arith.constant 0 : i32
    %c0_i32_0 = arith.constant 0 : i32
    return %arg0, %c0_i32 : i32, i32
  }
  func.func @transform_1(%arg0: i32) -> (i32, i32) {
    %c0_i32 = arith.constant 0 : i32
    %c0_i32_0 = arith.constant 0 : i32
    %c0_i32_1 = arith.constant 0 : i32
    return %c0_i32, %c0_i32_0 : i32, i32
  }
  func.func @transform_2(%arg0: i32) -> (i32, i32) {
    %c0_i32 = arith.constant 0 : i32
    %c0_i32_0 = arith.constant 0 : i32
    %c0_i32_1 = arith.constant 0 : i32
    return %c0_i32, %c0_i32_0 : i32, i32
  }
  func.func @transform_3(%arg0: i32) -> (i32, i32) {
    %c0_i32 = arith.constant 0 : i32
    %c0_i32_0 = arith.constant 0 : i32
    %c0_i32_1 = arith.constant 0 : i32
    return %c0_i32, %c0_i32_0 : i32, i32
  }
  func.func @transform_4(%arg0: i32) -> (i32, i32) {
    %c0_i32 = arith.constant 0 : i32
    %c0_i32_0 = arith.constant 0 : i32
    %c0_i32_1 = arith.constant 0 : i32
    return %c0_i32, %c0_i32_0 : i32, i32
  }
  func.func @transform_5(%arg0: i32) -> (i32, i32) {
    %c0_i32 = arith.constant 0 : i32
    %c0_i32_0 = arith.constant 0 : i32
    %c0_i32_1 = arith.constant 0 : i32
    return %c0_i32, %c0_i32_0 : i32, i32
  }
  func.func @transform_6(%arg0: i32) -> (i32, i32) {
    %c0_i32 = arith.constant 0 : i32
    %c0_i32_0 = arith.constant 0 : i32
    %c0_i32_1 = arith.constant 0 : i32
    return %c0_i32, %c0_i32_0 : i32, i32
  }
  func.func @transform_7(%arg0: i32) -> (i32, i32) {
    %c0_i32 = arith.constant 0 : i32
    %c0_i32_0 = arith.constant 0 : i32
    return %arg0, %c0_i32 : i32, i32
  }
}

</mosaic_0001>

<llo_original>
// kernel: linear_classifier_forward.1
$region0: #{linear_classifier_forward.1}
  #allocation0 [shape = 'u32[]', space=smem, size = 0x4, offset = 0x4, fixed_abs, tag = 'smem constant byte address 0x4 - core index']
  #allocation1 [shape = 'u32[72,128]{1,0:T(1,128)}', space=vmem, size = 0x9000, scoped, tag = 'internal scratch']
  %s0 = inlined_call_operand.vmem [shape: f32[8,64], index: 0, kind: input, shape index: {}]
  %s1 = inlined_call_operand.vmem [shape: bf16[64,128], index: 1, kind: input, shape index: {}]
  %s2 = inlined_call_operand.vmem [shape: f32[1,128], index: 2, kind: input, shape index: {}]
  %s3 = inlined_call_operand.vmem [shape: bf16[128,256], index: 3, kind: input, shape index: {}]
  %s4 = inlined_call_operand.vmem [shape: f32[1,256], index: 4, kind: input, shape index: {}]
  %s5 = inlined_call_operand.vmem [shape: bf16[256,128], index: 5, kind: input, shape index: {}]
  %s6 = inlined_call_operand.vmem [shape: f32[1,128], index: 6, kind: input, shape index: {}]
  %s7 = inlined_call_operand.hbm [shape: f32[8,128], index: 7, kind: output, shape index: {}]
  %s8 = sld [smem:[#allocation0]]
  $region38: #{linear_classifier_forward.1} parent=0
    _
  %s10 = ssub.s32 1, %s8
  %s11 = scalar_select 0, %s10, %s8
  $region1: #{linear_classifier_forward.1} parent=0
    #allocation2 [shape = 'u8[4096]{0}', space=vmem, size = 0x1000, scoped, tag = 'output window, operand 0, single buffered']
    #allocation3 [shape = 's32[1]{0}', space=sflag, size = 0x4, scoped, tag = 'scoped memory for linear_classifier_forward.1']
    %12 = vsyncpa [#allocation3], 0
    // Predicated region
    $region2: #{linear_classifier_forward.1} parent=1 // pred_check
      _
    $region3: #{linear_classifier_forward.1} parent=1 // pred_check_branch
      %14 = sbr.rel (0) target = $region5
    $region4: #{linear_classifier_forward.1} parent=1 // pred_region
      _
    $region5: #{linear_classifier_forward.1} parent=1 // pred_fallthru
      _
    // Predicated region
    $region6: #{linear_classifier_forward.1} parent=1 // pred_check
      _
    $region7: #{linear_classifier_forward.1} parent=1 // pred_check_branch
      %16 = sbr.rel (0) target = $region9
    $region8: #{linear_classifier_forward.1} parent=1 // pred_region
      _
    $region9: #{linear_classifier_forward.1} parent=1 // pred_fallthru
      _
    // Predicated region
    $region10: #{linear_classifier_forward.1} parent=1 // pred_check
      _
    $region11: #{linear_classifier_forward.1} parent=1 // pred_check_branch
      %18 = sbr.rel (0) target = $region13
    $region12: #{linear_classifier_forward.1} parent=1 // pred_region
      _
    $region13: #{linear_classifier_forward.1} parent=1 // pred_fallthru
      _
    // Predicated region
    $region14: #{linear_classifier_forward.1} parent=1 // pred_check
      _
    $region15: #{linear_classifier_forward.1} parent=1 // pred_check_branch
      %20 = sbr.rel (0) target = $region17
    $region16: #{linear_classifier_forward.1} parent=1 // pred_region
      _
    $region17: #{linear_classifier_forward.1} parent=1 // pred_fallthru
      _
    // Predicated region
    $region18: #{linear_classifier_forward.1} parent=1 // pred_check
      _
    $region19: #{linear_classifier_forward.1} parent=1 // pred_check_branch
      %22 = sbr.rel (0) target = $region21
    $region20: #{linear_classifier_forward.1} parent=1 // pred_region
      _
    $region21: #{linear_classifier_forward.1} parent=1 // pred_fallthru
      _
    // Predicated region
    $region22: #{linear_classifier_forward.1} parent=1 // pred_check
      _
    $region23: #{linear_classifier_forward.1} parent=1 // pred_check_branch
      %24 = sbr.rel (0) target = $region25
    $region24: #{linear_classifier_forward.1} parent=1 // pred_region
      _
    $region25: #{linear_classifier_forward.1} parent=1 // pred_fallthru
      _
    // Predicated region
    $region26: #{linear_classifier_forward.1} parent=1 // pred_check
      _
    $region27: #{linear_classifier_forward.1} parent=1 // pred_check_branch
      %26 = sbr.rel (0) target = $region29
    $region28: #{linear_classifier_forward.1} parent=1 // pred_region
      _
    $region29: #{linear_classifier_forward.1} parent=1 // pred_fallthru
      _
    %v28 = vld [vmem:[%s0] sm:$0xff]
    %v29 = vpack.c.bf16 %v28, %v28
    %v30 = vld [vmem:[%s1] sm:$0xf]
    %v31 = vld [vmem:[%s1 + $0x4] sm:$0xf]
    %v32 = vld [vmem:[%s1 + $0x8] sm:$0xf]
    %v33 = vld [vmem:[%s1 + $0xc] sm:$0xf]
    %v34 = vld [vmem:[%s1 + $0x10] sm:$0xf]
    %v35 = vld [vmem:[%s1 + $0x14] sm:$0xf]
    %v36 = vld [vmem:[%s1 + $0x18] sm:$0xf]
    %v37 = vld [vmem:[%s1 + $0x1c] sm:$0xf]
    %v38 = vld [vmem:[%s2] sm:$0x1]
    %v40 = vperm.slane %v38, 0
    %v50 = vunpack.c.l.b16 %v30
    %v51 = vunpack.c.l.b16 %v31
    %v52 = vunpack.c.l.b16 %v32
    %v53 = vunpack.c.l.b16 %v33
    %v54 = vunpack.c.l.b16 %v34
    %v55 = vunpack.c.l.b16 %v35
    %v56 = vunpack.c.l.b16 %v36
    %v57 = vunpack.c.l.b16 %v37
    %v58 = vpack.c.b16 %v51, %v50
    %v59 = vpack.c.b16 %v53, %v52
    %v60 = vpack.c.b16 %v55, %v54
    %v61 = vpack.c.b16 %v57, %v56
    %vm66 = vcmask 523264
    %v68 = vsel %vm66, %v29, 0
    %70 = vmatpush.bf16.msra.mxu0 0
    %71 = vmatpush.bf16.msra.mxu0 0
    %72 = vmatpush.bf16.msra.mxu0 0
    %73 = vmatpush.bf16.msra.mxu0 0
    %74 = vmatpush.bf16.msra.mxu0 %v61
    %75 = vmatpush.bf16.msra.mxu0 %v60
    %76 = vmatpush.bf16.msra.mxu0 %v59
    %77 = vmatpush.bf16.msra.mxu0 %v58
    %78 = vmatmul.bf16.gmra.mxu0 %v68
    %v79 = vpop.f32.mrf.mxu0
    %v80 = vadd.f32 %v40, %v79
    %v81 = vpop.f32.mrf.mxu0
    %82 = vdwg.mxu0
    %v83 = vmul.f32 %v80, 0.5
    %v84 = vtanh.pop %v83
    %v85 = vmul.f32 %v84, 0.5
    %v86 = vadd.f32 %v85, 0.5
    %v87 = vpack.c.bf16 %v86, %v86
    %v88 = vld [vmem:[%s3] sm:$0xff]
    %v89 = vld [vmem:[%s3 + $0x8] sm:$0xff]
    %v90 = vld [vmem:[%s3 + $0x10] sm:$0xff]
    %v91 = vld [vmem:[%s3 + $0x18] sm:$0xff]
    %v92 = vld [vmem:[%s3 + $0x20] sm:$0xff]
    %v93 = vld [vmem:[%s3 + $0x28] sm:$0xff]
    %v94 = vld [vmem:[%s3 + $0x30] sm:$0xff]
    %v95 = vld [vmem:[%s3 + $0x38] sm:$0xff]
    %v96 = vld [vmem:[%s3 + $0x40] sm:$0xff]
    %v97 = vld [vmem:[%s3 + $0x48] sm:$0xff]
    %v98 = vld [vmem:[%s3 + $0x50] sm:$0xff]
    %v99 = vld [vmem:[%s3 + $0x58] sm:$0xff]
    %v100 = vld [vmem:[%s3 + $0x60] sm:$0xff]
    %v101 = vld [vmem:[%s3 + $0x68] sm:$0xff]
    %v102 = vld [vmem:[%s3 + $0x70] sm:$0xff]
    %v103 = vld [vmem:[%s3 + $0x78] sm:$0xff]
    %v104 = vld [vmem:[%s4] sm:$0x3]
    %v106 = vperm.slane %v104, 0
    %v107 = vperm.slane %v104, 1
    %v126 = vunpack.c.l.b16 %v88
    %v127 = vunpack.c.h.b16 %v88
    %v128 = vunpack.c.l.b16 %v89
    %v129 = vunpack.c.h.b16 %v89
    %v130 = vunpack.c.l.b16 %v90
    %v131 = vunpack.c.h.b16 %v90
    %v132 = vunpack.c.l.b16 %v91
    %v133 = vunpack.c.h.b16 %v91
    %v134 = vunpack.c.l.b16 %v92
    %v135 = vunpack.c.h.b16 %v92
    %v136 = vunpack.c.l.b16 %v93
    %v137 = vunpack.c.h.b16 %v93
    %v138 = vunpack.c.l.b16 %v94
    %v139 = vunpack.c.h.b16 %v94
    %v140 = vunpack.c.l.b16 %v95
    %v141 = vunpack.c.h.b16 %v95
    %v142 = vunpack.c.l.b16 %v96
    %v143 = vunpack.c.h.b16 %v96
    %v144 = vunpack.c.l.b16 %v97
    %v145 = vunpack.c.h.b16 %v97
    %v146 = vunpack.c.l.b16 %v98
    %v147 = vunpack.c.h.b16 %v98
    %v148 = vunpack.c.l.b16 %v99
    %v149 = vunpack.c.h.b16 %v99
    %v150 = vunpack.c.l.b16 %v100
    %v151 = vunpack.c.h.b16 %v100
    %v152 = vunpack.c.l.b16 %v101
    %v153 = vunpack.c.h.b16 %v101
    %v154 = vunpack.c.l.b16 %v102
    %v155 = vunpack.c.h.b16 %v102
    %v156 = vunpack.c.l.b16 %v103
    %v157 = vunpack.c.h.b16 %v103
    %v158 = vpack.c.b16 %v128, %v126
    %v159 = vpack.c.b16 %v129, %v127
    %v160 = vpack.c.b16 %v132, %v130
    %v161 = vpack.c.b16 %v133, %v131
    %v162 = vpack.c.b16 %v136, %v134
    %v163 = vpack.c.b16 %v137, %v135
    %v164 = vpack.c.b16 %v140, %v138
    %v165 = vpack.c.b16 %v141, %v139
    %v166 = vpack.c.b16 %v144, %v142
    %v167 = vpack.c.b16 %v145, %v143
    %v168 = vpack.c.b16 %v148, %v146
    %v169 = vpack.c.b16 %v149, %v147
    %v170 = vpack.c.b16 %v152, %v150
    %v171 = vpack.c.b16 %v153, %v151
    %v172 = vpack.c.b16 %v156, %v154
    %v173 = vpack.c.b16 %v157, %v155
    %190 = vmatpush.bf16.msra.mxu0 %v172
    %191 = vmatpush.bf16.msra.mxu0 %v170
    %192 = vmatpush.bf16.msra.mxu0 %v168
    %193 = vmatpush.bf16.msra.mxu0 %v166
    %194 = vmatpush.bf16.msra.mxu0 %v164
    %195 = vmatpush.bf16.msra.mxu0 %v162
    %196 = vmatpush.bf16.msra.mxu0 %v160
    %197 = vmatpush.bf16.msra.mxu0 %v158
    %198 = vmatmul.bf16.gmra.mxu0 %v87
    %v199 = vpop.f32.mrf.mxu0
    %v200 = vadd.f32 %v106, %v199
    %v201 = vpop.f32.mrf.mxu0
    %202 = vdwg.mxu0
    %203 = vmatpush.bf16.msra.mxu0 %v173
    %204 = vmatpush.bf16.msra.mxu0 %v171
    %205 = vmatpush.bf16.msra.mxu0 %v169
    %206 = vmatpush.bf16.msra.mxu0 %v167
    %207 = vmatpush.bf16.msra.mxu0 %v165
    %208 = vmatpush.bf16.msra.mxu0 %v163
    %209 = vmatpush.bf16.msra.mxu0 %v161
    %210 = vmatpush.bf16.msra.mxu0 %v159
    %211 = vmatmul.bf16.gmra.mxu0 %v87
    %v212 = vpop.f32.mrf.mxu0
    %v213 = vadd.f32 %v107, %v212
    %v214 = vpop.f32.mrf.mxu0
    %215 = vdwg.mxu0
    %v216 = vmul.f32 %v200, 0.5
    %v217 = vmul.f32 %v213, 0.5
    %v218 = vtanh.pop %v216
    %v219 = vtanh.pop %v217
    %v220 = vmul.f32 %v218, 0.5
    %v221 = vmul.f32 %v219, 0.5
    %v222 = vadd.f32 %v220, 0.5
    %v223 = vadd.f32 %v221, 0.5
    %v224 = vpack.c.bf16 %v222, %v222
    %v225 = vpack.c.bf16 %v223, %v223
    %v226 = vld [vmem:[%s5] sm:$0xf]
    %v227 = vld [vmem:[%s5 + $0x4] sm:$0xf]
    %v228 = vld [vmem:[%s5 + $0x8] sm:$0xf]
    %v229 = vld [vmem:[%s5 + $0xc] sm:$0xf]
    %v230 = vld [vmem:[%s5 + $0x10] sm:$0xf]
    %v231 = vld [vmem:[%s5 + $0x14] sm:$0xf]
    %v232 = vld [vmem:[%s5 + $0x18] sm:$0xf]
    %v233 = vld [vmem:[%s5 + $0x1c] sm:$0xf]
    %v234 = vld [vmem:[%s5 + $0x20] sm:$0xf]
    %v235 = vld [vmem:[%s5 + $0x24] sm:$0xf]
    %v236 = vld [vmem:[%s5 + $0x28] sm:$0xf]
    %v237 = vld [vmem:[%s5 + $0x2c] sm:$0xf]
    %v238 = vld [vmem:[%s5 + $0x30] sm:$0xf]
    %v239 = vld [vmem:[%s5 + $0x34] sm:$0xf]
    %v240 = vld [vmem:[%s5 + $0x38] sm:$0xf]
    %v241 = vld [vmem:[%s5 + $0x3c] sm:$0xf]
    %v242 = vld [vmem:[%s5 + $0x40] sm:$0xf]
    %v243 = vld [vmem:[%s5 + $0x44] sm:$0xf]
    %v244 = vld [vmem:[%s5 + $0x48] sm:$0xf]
    %v245 = vld [vmem:[%s5 + $0x4c] sm:$0xf]
    %v246 = vld [vmem:[%s5 + $0x50] sm:$0xf]
    %v247 = vld [vmem:[%s5 + $0x54] sm:$0xf]
    %v248 = vld [vmem:[%s5 + $0x58] sm:$0xf]
    %v249 = vld [vmem:[%s5 + $0x5c] sm:$0xf]
    %v250 = vld [vmem:[%s5 + $0x60] sm:$0xf]
    %v251 = vld [vmem:[%s5 + $0x64] sm:$0xf]
    %v252 = vld [vmem:[%s5 + $0x68] sm:$0xf]
    %v253 = vld [vmem:[%s5 + $0x6c] sm:$0xf]
    %v254 = vld [vmem:[%s5 + $0x70] sm:$0xf]
    %v255 = vld [vmem:[%s5 + $0x74] sm:$0xf]
    %v256 = vld [vmem:[%s5 + $0x78] sm:$0xf]
    %v257 = vld [vmem:[%s5 + $0x7c] sm:$0xf]
    %v258 = vld [vmem:[%s6] sm:$0x1]
    %v260 = vperm.slane %v258, 0
    %v294 = vunpack.c.l.b16 %v226
    %v295 = vunpack.c.l.b16 %v227
    %v296 = vunpack.c.l.b16 %v228
    %v297 = vunpack.c.l.b16 %v229
    %v298 = vunpack.c.l.b16 %v230
    %v299 = vunpack.c.l.b16 %v231
    %v300 = vunpack.c.l.b16 %v232
    %v301 = vunpack.c.l.b16 %v233
    %v302 = vunpack.c.l.b16 %v234
    %v303 = vunpack.c.l.b16 %v235
    %v304 = vunpack.c.l.b16 %v236
    %v305 = vunpack.c.l.b16 %v237
    %v306 = vunpack.c.l.b16 %v238
    %v307 = vunpack.c.l.b16 %v239
    %v308 = vunpack.c.l.b16 %v240
    %v309 = vunpack.c.l.b16 %v241
    %v310 = vunpack.c.l.b16 %v242
    %v311 = vunpack.c.l.b16 %v243
    %v312 = vunpack.c.l.b16 %v244
    %v313 = vunpack.c.l.b16 %v245
    %v314 = vunpack.c.l.b16 %v246
    %v315 = vunpack.c.l.b16 %v247
    %v316 = vunpack.c.l.b16 %v248
    %v317 = vunpack.c.l.b16 %v249
    %v318 = vunpack.c.l.b16 %v250
    %v319 = vunpack.c.l.b16 %v251
    %v320 = vunpack.c.l.b16 %v252
    %v321 = vunpack.c.l.b16 %v253
    %v322 = vunpack.c.l.b16 %v254
    %v323 = vunpack.c.l.b16 %v255
    %v324 = vunpack.c.l.b16 %v256
    %v325 = vunpack.c.l.b16 %v257
    %v326 = vpack.c.b16 %v295, %v294
    %v327 = vpack.c.b16 %v297, %v296
    %v328 = vpack.c.b16 %v299, %v298
    %v329 = vpack.c.b16 %v301, %v300
    %v330 = vpack.c.b16 %v303, %v302
    %v331 = vpack.c.b16 %v305, %v304
    %v332 = vpack.c.b16 %v307, %v306
    %v333 = vpack.c.b16 %v309, %v308
    %v334 = vpack.c.b16 %v311, %v310
    %v335 = vpack.c.b16 %v313, %v312
    %v336 = vpack.c.b16 %v315, %v314
    %v337 = vpack.c.b16 %v317, %v316
    %v338 = vpack.c.b16 %v319, %v318
    %v339 = vpack.c.b16 %v321, %v320
    %v340 = vpack.c.b16 %v323, %v322
    %v341 = vpack.c.b16 %v325, %v324
    %358 = vmatpush.bf16.msra.mxu0 %v333
    %359 = vmatpush.bf16.msra.mxu0 %v332
    %360 = vmatpush.bf16.msra.mxu0 %v331
    %361 = vmatpush.bf16.msra.mxu0 %v330
    %362 = vmatpush.bf16.msra.mxu0 %v329
    %363 = vmatpush.bf16.msra.mxu0 %v328
    %364 = vmatpush.bf16.msra.mxu0 %v327
    %365 = vmatpush.bf16.msra.mxu0 %v326
    %366 = vmatmul.bf16.gmra.mxu0 %v224
    %v367 = vpop.f32.mrf.mxu0
    %v368 = vadd.f32 %v260, %v367
    %v369 = vpop.f32.mrf.mxu0
    %370 = vdwg.mxu0
    %371 = vmatpush.bf16.msra.mxu0 %v341
    %372 = vmatpush.bf16.msra.mxu0 %v340
    %373 = vmatpush.bf16.msra.mxu0 %v339
    %374 = vmatpush.bf16.msra.mxu0 %v338
    %375 = vmatpush.bf16.msra.mxu0 %v337
    %376 = vmatpush.bf16.msra.mxu0 %v336
    %377 = vmatpush.bf16.msra.mxu0 %v335
    %378 = vmatpush.bf16.msra.mxu0 %v334
    %379 = vmatmul.bf16.gmra.mxu0 %v225
    %v380 = vpop.f32.mrf.mxu0
    %v381 = vadd.f32 %v368, %v380
    %v382 = vpop.f32.mrf.mxu0
    %383 = vdwg.mxu0
    %384 = vst [vmem:[#allocation2] sm:$0xff] %v381
    // Predicated region
    $region30: #{linear_classifier_forward.1} parent=1 // pred_check
      _
    $region31: #{linear_classifier_forward.1} parent=1 // pred_check_branch
      %386 = sbr.rel (0) target = $region33
    $region32: #{linear_classifier_forward.1} parent=1 // pred_region
      %388 = vsyncadd [#allocation3], 0
      %s390 = sshll.u32 [#allocation2], 4
      %s391 = int_to_ptr.vmem [resolvable:$true] %s390
      %s392 = sshll.u32 %s7, 4
      %s393 = int_to_ptr.hbm [resolvable:$true] %s392
      %395 = dma.vmem_to_hbm [thread:$0]  %s391, 128, %s393, [#allocation3]
    $region33: #{linear_classifier_forward.1} parent=1 // pred_fallthru
      _
    // Predicated region
    $region34: #{linear_classifier_forward.1} parent=1 // pred_check
      _
    $region35: #{linear_classifier_forward.1} parent=1 // pred_check_branch
      %397 = sbr.rel (0) target = $region37
    $region36: #{linear_classifier_forward.1} parent=1 // pred_region
      %399 = dma.done [#allocation3], 128
    $region37: #{linear_classifier_forward.1} parent=1 // pred_fallthru
      _
    %400 = vsyncpa [#allocation3], 1

</llo_original>
